<compile_context>
chip_gen: v5e
topology: v5e:2x2
jax: 0.10.0
libtpu: 0.0.40
codegen_flags: <defaults>
</compile_context>

<pallas_src>
import jax
import jax.numpy as jnp
from jax.experimental import pallas as pl
from jax.experimental.pallas import tpu as pltpu

DIMS = [5, 32, 64, 32, 16, 6]        # fc1..fc5 (in, out) chain
NUM_LAYERS = len(DIMS) - 1           # 5
PAD = 128                            # lane-padded hidden width
IN_PAD = 8                           # padded input feature width (5 -> 8)
OUT_PAD = 8                          # padded output feature width (6 -> 8)
OUT_DIM = DIMS[-1]                   # 6
TILE_CAP = 1024                      # max batch-tile rows per grid step


def _round_up(x, m):
    return ((x + m - 1) // m) * m


def _mlp_kernel(x_ref, w1_ref, wmid_ref, w5_ref, bmid_ref, b5_ref, o_ref):
    # x_ref:   (tile_b, 8)      f32
    # w1_ref:  (8, 128)         bf16   (fc1, zero-padded)
    # wmid_ref:(3, 128, 128)    bf16   (fc2..fc4, zero-padded)
    # w5_ref:  (128, 8)         bf16   (fc5, zero-padded)
    # bmid_ref:(4, 1, 128)      f32    (fc1..fc4 biases, zero-padded)
    # b5_ref:  (1, 8)           f32    (fc5 bias, zero-padded)
    # o_ref:   (tile_b, 8)      f32
    h = jnp.dot(x_ref[...].astype(jnp.bfloat16), w1_ref[...],
                preferred_element_type=jnp.float32) + bmid_ref[0]
    h = 0.5 * jnp.tanh(0.5 * h) + 0.5            # sigmoid
    for l in range(3):                            # fc2, fc3, fc4
        h = jnp.dot(h.astype(jnp.bfloat16), wmid_ref[l],
                    preferred_element_type=jnp.float32) + bmid_ref[l + 1]
        h = 0.5 * jnp.tanh(0.5 * h) + 0.5
    h = jnp.dot(h.astype(jnp.bfloat16), w5_ref[...],
                preferred_element_type=jnp.float32) + b5_ref[...]
    o_ref[...] = h


def pack_params(params):
    """One-time packing of f32 (W, b) pairs into padded bf16/f32 slabs.

    Zero padding keeps the math exact: padded activation lanes turn into 0.5
    after the sigmoid but always hit zero weight rows in the next layer.
    """
    (w1, b1), (w2, b2), (w3, b3), (w4, b4), (w5, b5) = params

    def pad_w(w, rows, cols):
        out = jnp.zeros((rows, cols), jnp.float32)
        return out.at[: w.shape[0], : w.shape[1]].set(w)

    def pad_b(b, cols):
        out = jnp.zeros((1, cols), jnp.float32)
        return out.at[0, : b.shape[0]].set(b)

    w1_p = pad_w(w1, IN_PAD, PAD).astype(jnp.bfloat16)                   # (8,128)
    w_mid = jnp.stack([pad_w(w, PAD, PAD) for w in (w2, w3, w4)]
                      ).astype(jnp.bfloat16)                             # (3,128,128)
    w5_p = pad_w(w5, PAD, OUT_PAD).astype(jnp.bfloat16)                  # (128,8)
    b_mid = jnp.stack([pad_b(b, PAD) for b in (b1, b2, b3, b4)])         # (4,1,128)
    b5_p = pad_b(b5, OUT_PAD)                                            # (1,8)
    return w1_p, w_mid, w5_p, b_mid, b5_p


@jax.jit
def mlp_forward(x, packed):
    """x: (batch, 5) f32; packed: output of pack_params (called once)."""
    w1, w_mid, w5, b_mid, b5 = packed
    batch, in_dim = x.shape

    # Batch tile: up to 1024 rows; when there is enough work, cap at half the
    # padded batch so the grid has >= 2 steps (v7x: both TensorCores busy).
    b8 = max(8, _round_up(batch, 8))
    if b8 < 16:
        tile_b = b8
    else:
        tile_b = min(TILE_CAP, _round_up(b8 // 2, 8))
    padded_batch = _round_up(batch, tile_b)

    # Narrow HBM pad: only 5 -> 8 feature lanes (plus batch rows).
    x_pad = jnp.zeros((padded_batch, IN_PAD), jnp.float32)
    x_pad = x_pad.at[:batch, :in_dim].set(x)

    out = pl.pallas_call(
        _mlp_kernel,
        out_shape=jax.ShapeDtypeStruct((padded_batch, OUT_PAD), jnp.float32),
        grid_spec=pltpu.PrefetchScalarGridSpec(
            num_scalar_prefetch=0,
            grid=(padded_batch // tile_b,),
            in_specs=[
                pl.BlockSpec((tile_b, IN_PAD), lambda i: (i, 0)),
                pl.BlockSpec((IN_PAD, PAD), lambda i: (0, 0)),
                pl.BlockSpec((3, PAD, PAD), lambda i: (0, 0, 0)),
                pl.BlockSpec((PAD, OUT_PAD), lambda i: (0, 0)),
                pl.BlockSpec((4, 1, PAD), lambda i: (0, 0, 0)),
                pl.BlockSpec((1, OUT_PAD), lambda i: (0, 0)),
            ],
            out_specs=pl.BlockSpec((tile_b, OUT_PAD), lambda i: (i, 0)),
        ),
        compiler_params=pltpu.CompilerParams(
            dimension_semantics=("parallel",)),
    )(x_pad, w1, w_mid, w5, b_mid, b5)

    return out[:batch, :OUT_DIM]


def init_params(key):
    """Deterministic init mimicking PyTorch nn.Linear default
    (uniform in [-1/sqrt(fan_in), 1/sqrt(fan_in)]); W stored (in, out)."""
    params = []
    for i in range(NUM_LAYERS):
        fan_in, fan_out = DIMS[i], DIMS[i + 1]
        key, kw, kb = jax.random.split(key, 3)
        bound = 1.0 / jnp.sqrt(jnp.float32(fan_in))
        w = jax.random.uniform(kw, (fan_in, fan_out), jnp.float32,
                               minval=-bound, maxval=bound)
        b = jax.random.uniform(kb, (fan_out,), jnp.float32,
                               minval=-bound, maxval=bound)
        params.append((w, b))
    return params


def reference_forward(x, params):
    h = x
    for i, (w, b) in enumerate(params):
        h = jnp.dot(h, w, precision=jax.lax.Precision.HIGHEST) + b
        if i < len(params) - 1:
            h = jax.nn.sigmoid(h)
    return h


if __name__ == "__main__":
    key = jax.random.PRNGKey(0)
    key, kx = jax.random.split(key)

    batch = 8
    x = jax.random.normal(kx, (batch, DIMS[0]), dtype=jnp.float32)
    params = init_params(key)
    packed = pack_params(params)          # one-time packing, outside the jit

    out = mlp_forward(x, packed)
    out = jax.block_until_ready(out)

    ref = reference_forward(x, params)
    assert out.shape == (batch, OUT_DIM), out.shape
    # Kernel runs its matmuls in bf16 (f32 accumulation); compare against the
    # exact-f32 reference with a bf16-appropriate tolerance.
    assert jnp.allclose(out, ref, atol=3e-2, rtol=3e-2), "mismatch vs reference"

    print("KERNEL_OK")
</pallas_src>

<mosaic_0001>
module attributes {stable_mosaic.version = 11 : i64} {
  func.func @_mlp_kernel(%arg0: i32, %arg1: memref<8x8xf32, #tpu.memory_space<vmem>>, %arg2: memref<8x128xbf16, #tpu.memory_space<vmem>>, %arg3: memref<3x128x128xbf16, #tpu.memory_space<vmem>>, %arg4: memref<128x8xbf16, #tpu.memory_space<vmem>>, %arg5: memref<4x1x128xf32, #tpu.memory_space<vmem>>, %arg6: memref<1x8xf32, #tpu.memory_space<vmem>>, %arg7: memref<8x8xf32, #tpu.memory_space<vmem>>) attributes {dimension_semantics = [#tpu.dimension_semantics<parallel>], iteration_bounds = array<i64: 1>, scalar_prefetch = 0 : i64, scratch_operands = 0 : i64, tpu.core_type = #tpu.core_type<tc>, window_params = [{transform_indices = @transform_0, window_bounds = array<i64: 8, 8>}, {pipeline_mode = #tpu.pipeline_mode<synchronous>, transform_indices = @transform_1, window_bounds = array<i64: 8, 128>}, {pipeline_mode = #tpu.pipeline_mode<synchronous>, transform_indices = @transform_2, window_bounds = array<i64: 3, 128, 128>}, {pipeline_mode = #tpu.pipeline_mode<synchronous>, transform_indices = @transform_3, window_bounds = array<i64: 128, 8>}, {pipeline_mode = #tpu.pipeline_mode<synchronous>, transform_indices = @transform_4, window_bounds = array<i64: 4, 1, 128>}, {pipeline_mode = #tpu.pipeline_mode<synchronous>, transform_indices = @transform_5, window_bounds = array<i64: 1, 8>}, {transform_indices = @transform_6, window_bounds = array<i64: 8, 8>}]} {
    %c0 = arith.constant 0 : index
    %c0_0 = arith.constant 0 : index
    %0 = vector.load %arg1[%c0, %c0_0] : memref<8x8xf32, #tpu.memory_space<vmem>>, vector<8x8xf32>
    %1 = arith.truncf %0 : vector<8x8xf32> to vector<8x8xbf16>
    %c0_1 = arith.constant 0 : index
    %c0_2 = arith.constant 0 : index
    %2 = vector.load %arg2[%c0_1, %c0_2] : memref<8x128xbf16, #tpu.memory_space<vmem>>, vector<8x128xbf16>
    %cst = arith.constant dense<0.000000e+00> : vector<8x128xf32>
    %3 = tpu.matmul %1, %2, %cst {dimension_numbers = #tpu.dot_dimension_numbers<[1], [0], [0], [1], [0, 0, 1, 1], [], []>} : vector<8x8xbf16>, vector<8x128xbf16>, vector<8x128xf32> -> vector<8x128xf32>
    %c0_3 = arith.constant 0 : index
    %c0_4 = arith.constant 0 : index
    %c0_5 = arith.constant 0 : index
    %4 = vector.load %arg5[%c0_3, %c0_4, %c0_5] : memref<4x1x128xf32, #tpu.memory_space<vmem>>, vector<1x1x128xf32>
    %5 = vector.shape_cast %4 : vector<1x1x128xf32> to vector<1x128xf32>
    %6 = vector.broadcast %5 : vector<1x128xf32> to vector<8x128xf32>
    %7 = arith.addf %3, %6 : vector<8x128xf32>
    %cst_6 = arith.constant 5.000000e-01 : f32
    %8 = vector.broadcast %cst_6 : f32 to vector<8x128xf32>
    %9 = arith.mulf %8, %7 : vector<8x128xf32>
    %10 = math.tanh %9 : vector<8x128xf32>
    %cst_7 = arith.constant 5.000000e-01 : f32
    %11 = vector.broadcast %cst_7 : f32 to vector<8x128xf32>
    %12 = arith.mulf %11, %10 : vector<8x128xf32>
    %cst_8 = arith.constant 5.000000e-01 : f32
    %13 = vector.broadcast %cst_8 : f32 to vector<8x128xf32>
    %14 = arith.addf %12, %13 : vector<8x128xf32>
    %15 = arith.truncf %14 : vector<8x128xf32> to vector<8x128xbf16>
    %c0_9 = arith.constant 0 : index
    %c0_10 = arith.constant 0 : index
    %c0_11 = arith.constant 0 : index
    %16 = vector.load %arg3[%c0_9, %c0_10, %c0_11] : memref<3x128x128xbf16, #tpu.memory_space<vmem>>, vector<1x128x128xbf16>
    %17 = vector.shape_cast %16 : vector<1x128x128xbf16> to vector<128x128xbf16>
    %cst_12 = arith.constant dense<0.000000e+00> : vector<8x128xf32>
    %18 = tpu.matmul %15, %17, %cst_12 {dimension_numbers = #tpu.dot_dimension_numbers<[1], [0], [0], [1], [0, 0, 1, 1], [], []>} : vector<8x128xbf16>, vector<128x128xbf16>, vector<8x128xf32> -> vector<8x128xf32>
    %c1 = arith.constant 1 : index
    %c0_13 = arith.constant 0 : index
    %c0_14 = arith.constant 0 : index
    %19 = vector.load %arg5[%c1, %c0_13, %c0_14] : memref<4x1x128xf32, #tpu.memory_space<vmem>>, vector<1x1x128xf32>
    %20 = vector.shape_cast %19 : vector<1x1x128xf32> to vector<1x128xf32>
    %21 = vector.broadcast %20 : vector<1x128xf32> to vector<8x128xf32>
    %22 = arith.addf %18, %21 : vector<8x128xf32>
    %cst_15 = arith.constant 5.000000e-01 : f32
    %23 = vector.broadcast %cst_15 : f32 to vector<8x128xf32>
    %24 = arith.mulf %23, %22 : vector<8x128xf32>
    %25 = math.tanh %24 : vector<8x128xf32>
    %cst_16 = arith.constant 5.000000e-01 : f32
    %26 = vector.broadcast %cst_16 : f32 to vector<8x128xf32>
    %27 = arith.mulf %26, %25 : vector<8x128xf32>
    %cst_17 = arith.constant 5.000000e-01 : f32
    %28 = vector.broadcast %cst_17 : f32 to vector<8x128xf32>
    %29 = arith.addf %27, %28 : vector<8x128xf32>
    %30 = arith.truncf %29 : vector<8x128xf32> to vector<8x128xbf16>
    %c1_18 = arith.constant 1 : index
    %c0_19 = arith.constant 0 : index
    %c0_20 = arith.constant 0 : index
    %31 = vector.load %arg3[%c1_18, %c0_19, %c0_20] : memref<3x128x128xbf16, #tpu.memory_space<vmem>>, vector<1x128x128xbf16>
    %32 = vector.shape_cast %31 : vector<1x128x128xbf16> to vector<128x128xbf16>
    %cst_21 = arith.constant dense<0.000000e+00> : vector<8x128xf32>
    %33 = tpu.matmul %30, %32, %cst_21 {dimension_numbers = #tpu.dot_dimension_numbers<[1], [0], [0], [1], [0, 0, 1, 1], [], []>} : vector<8x128xbf16>, vector<128x128xbf16>, vector<8x128xf32> -> vector<8x128xf32>
    %c2 = arith.constant 2 : index
    %c0_22 = arith.constant 0 : index
    %c0_23 = arith.constant 0 : index
    %34 = vector.load %arg5[%c2, %c0_22, %c0_23] : memref<4x1x128xf32, #tpu.memory_space<vmem>>, vector<1x1x128xf32>
    %35 = vector.shape_cast %34 : vector<1x1x128xf32> to vector<1x128xf32>
    %36 = vector.broadcast %35 : vector<1x128xf32> to vector<8x128xf32>
    %37 = arith.addf %33, %36 : vector<8x128xf32>
    %cst_24 = arith.constant 5.000000e-01 : f32
    %38 = vector.broadcast %cst_24 : f32 to vector<8x128xf32>
    %39 = arith.mulf %38, %37 : vector<8x128xf32>
    %40 = math.tanh %39 : vector<8x128xf32>
    %cst_25 = arith.constant 5.000000e-01 : f32
    %41 = vector.broadcast %cst_25 : f32 to vector<8x128xf32>
    %42 = arith.mulf %41, %40 : vector<8x128xf32>
    %cst_26 = arith.constant 5.000000e-01 : f32
    %43 = vector.broadcast %cst_26 : f32 to vector<8x128xf32>
    %44 = arith.addf %42, %43 : vector<8x128xf32>
    %45 = arith.truncf %44 : vector<8x128xf32> to vector<8x128xbf16>
    %c2_27 = arith.constant 2 : index
    %c0_28 = arith.constant 0 : index
    %c0_29 = arith.constant 0 : index
    %46 = vector.load %arg3[%c2_27, %c0_28, %c0_29] : memref<3x128x128xbf16, #tpu.memory_space<vmem>>, vector<1x128x128xbf16>
    %47 = vector.shape_cast %46 : vector<1x128x128xbf16> to vector<128x128xbf16>
    %cst_30 = arith.constant dense<0.000000e+00> : vector<8x128xf32>
    %48 = tpu.matmul %45, %47, %cst_30 {dimension_numbers = #tpu.dot_dimension_numbers<[1], [0], [0], [1], [0, 0, 1, 1], [], []>} : vector<8x128xbf16>, vector<128x128xbf16>, vector<8x128xf32> -> vector<8x128xf32>
    %c3 = arith.constant 3 : index
    %c0_31 = arith.constant 0 : index
    %c0_32 = arith.constant 0 : index
    %49 = vector.load %arg5[%c3, %c0_31, %c0_32] : memref<4x1x128xf32, #tpu.memory_space<vmem>>, vector<1x1x128xf32>
    %50 = vector.shape_cast %49 : vector<1x1x128xf32> to vector<1x128xf32>
    %51 = vector.broadcast %50 : vector<1x128xf32> to vector<8x128xf32>
    %52 = arith.addf %48, %51 : vector<8x128xf32>
    %cst_33 = arith.constant 5.000000e-01 : f32
    %53 = vector.broadcast %cst_33 : f32 to vector<8x128xf32>
    %54 = arith.mulf %53, %52 : vector<8x128xf32>
    %55 = math.tanh %54 : vector<8x128xf32>
    %cst_34 = arith.constant 5.000000e-01 : f32
    %56 = vector.broadcast %cst_34 : f32 to vector<8x128xf32>
    %57 = arith.mulf %56, %55 : vector<8x128xf32>
    %cst_35 = arith.constant 5.000000e-01 : f32
    %58 = vector.broadcast %cst_35 : f32 to vector<8x128xf32>
    %59 = arith.addf %57, %58 : vector<8x128xf32>
    %60 = arith.truncf %59 : vector<8x128xf32> to vector<8x128xbf16>
    %c0_36 = arith.constant 0 : index
    %c0_37 = arith.constant 0 : index
    %61 = vector.load %arg4[%c0_36, %c0_37] : memref<128x8xbf16, #tpu.memory_space<vmem>>, vector<128x8xbf16>
    %cst_38 = arith.constant dense<0.000000e+00> : vector<8x8xf32>
    %62 = tpu.matmul %60, %61, %cst_38 {dimension_numbers = #tpu.dot_dimension_numbers<[1], [0], [0], [1], [0, 0, 1, 1], [], []>} : vector<8x128xbf16>, vector<128x8xbf16>, vector<8x8xf32> -> vector<8x8xf32>
    %c0_39 = arith.constant 0 : index
    %c0_40 = arith.constant 0 : index
    %63 = vector.load %arg6[%c0_39, %c0_40] : memref<1x8xf32, #tpu.memory_space<vmem>>, vector<1x8xf32>
    %64 = vector.broadcast %63 : vector<1x8xf32> to vector<8x8xf32>
    %65 = arith.addf %62, %64 : vector<8x8xf32>
    %c0_41 = arith.constant 0 : index
    %c0_42 = arith.constant 0 : index
    %66 = vector.load %arg7[%c0_41, %c0_42] : memref<8x8xf32, #tpu.memory_space<vmem>>, vector<8x8xf32>
    tpu.vector_store %arg7[%c0_41, %c0_42], %65 {strides = array<i32>} : memref<8x8xf32, #tpu.memory_space<vmem>>, vector<8x8xf32>,
    return
  }
  func.func @transform_0(%arg0: i32) -> (i32, i32) {
    %c0_i32 = arith.constant 0 : i32
    %c0_i32_0 = arith.constant 0 : i32
    return %arg0, %c0_i32 : i32, i32
  }
  func.func @transform_1(%arg0: i32) -> (i32, i32) {
    %c0_i32 = arith.constant 0 : i32
    %c0_i32_0 = arith.constant 0 : i32
    %c0_i32_1 = arith.constant 0 : i32
    return %c0_i32, %c0_i32_0 : i32, i32
  }
  func.func @transform_2(%arg0: i32) -> (i32, i32, i32) {
    %c0_i32 = arith.constant 0 : i32
    %c0_i32_0 = arith.constant 0 : i32
    %c0_i32_1 = arith.constant 0 : i32
    %c0_i32_2 = arith.constant 0 : i32
    return %c0_i32, %c0_i32_0, %c0_i32_1 : i32, i32, i32
  }
  func.func @transform_3(%arg0: i32) -> (i32, i32) {
    %c0_i32 = arith.constant 0 : i32
    %c0_i32_0 = arith.constant 0 : i32
    %c0_i32_1 = arith.constant 0 : i32
    return %c0_i32, %c0_i32_0 : i32, i32
  }
  func.func @transform_4(%arg0: i32) -> (i32, i32, i32) {
    %c0_i32 = arith.constant 0 : i32
    %c0_i32_0 = arith.constant 0 : i32
    %c0_i32_1 = arith.constant 0 : i32
    %c0_i32_2 = arith.constant 0 : i32
    return %c0_i32, %c0_i32_0, %c0_i32_1 : i32, i32, i32
  }
  func.func @transform_5(%arg0: i32) -> (i32, i32) {
    %c0_i32 = arith.constant 0 : i32
    %c0_i32_0 = arith.constant 0 : i32
    %c0_i32_1 = arith.constant 0 : i32
    return %c0_i32, %c0_i32_0 : i32, i32
  }
  func.func @transform_6(%arg0: i32) -> (i32, i32) {
    %c0_i32 = arith.constant 0 : i32
    %c0_i32_0 = arith.constant 0 : i32
    return %arg0, %c0_i32 : i32, i32
  }
}

</mosaic_0001>

<llo_original>
// kernel: mlp_forward.1
$region0: #{mlp_forward.1}
  #allocation0 [shape = 'u32[]', space=smem, size = 0x4, offset = 0x4, fixed_abs, tag = 'smem constant byte address 0x4 - core index']
  #allocation1 [shape = 'u32[72,128]{1,0:T(1,128)}', space=vmem, size = 0x9000, scoped, tag = 'internal scratch']
  %s0 = inlined_call_operand.vmem [shape: f32[8,8], index: 0, kind: input, shape index: {}]
  %s1 = inlined_call_operand.vmem [shape: bf16[8,128], index: 1, kind: input, shape index: {}]
  %s2 = inlined_call_operand.hbm [shape: bf16[3,128,128], index: 2, kind: input, shape index: {}]
  %s3 = inlined_call_operand.vmem [shape: bf16[128,8], index: 3, kind: input, shape index: {}]
  %s4 = inlined_call_operand.vmem [shape: f32[4,1,128], index: 4, kind: input, shape index: {}]
  %s5 = inlined_call_operand.vmem [shape: f32[1,8], index: 5, kind: input, shape index: {}]
  %s6 = inlined_call_operand.hbm [shape: f32[8,8], index: 6, kind: output, shape index: {}]
  %s7 = sld [smem:[#allocation0]]
  $region38: #{mlp_forward.1} parent=0
    _
  %s9 = ssub.s32 1, %s7
  %s10 = scalar_select 0, %s9, %s7
  $region1: #{mlp_forward.1} parent=0
    #allocation2 [shape = 'u8[98304]{0}', space=vmem, size = 0x18000, scoped, tag = 'input window, operand 2, single buffered']
    #allocation3 [shape = 's32[1]{0}', space=sflag, size = 0x4, scoped, tag = 'scoped memory for mlp_forward.1']
    #allocation4 [shape = 's32[1]{0}', space=sflag, size = 0x4, scoped, tag = 'scoped memory for mlp_forward.1']
    #allocation5 [shape = 'u8[4096]{0}', space=vmem, size = 0x1000, scoped, tag = 'output window, operand 0, single buffered']
    %11 = vsyncpa [#allocation3], 0
    %12 = vsyncpa [#allocation4], 0
    // Predicated region
    $region2: #{mlp_forward.1} parent=1 // pred_check
      _
    $region3: #{mlp_forward.1} parent=1 // pred_check_branch
      %14 = sbr.rel (0) target = $region5
    $region4: #{mlp_forward.1} parent=1 // pred_region
      _
    $region5: #{mlp_forward.1} parent=1 // pred_fallthru
      _
    // Predicated region
    $region6: #{mlp_forward.1} parent=1 // pred_check
      _
    $region7: #{mlp_forward.1} parent=1 // pred_check_branch
      %16 = sbr.rel (0) target = $region9
    $region8: #{mlp_forward.1} parent=1 // pred_region
      _
    $region9: #{mlp_forward.1} parent=1 // pred_fallthru
      _
    // Predicated region
    $region10: #{mlp_forward.1} parent=1 // pred_check
      _
    $region11: #{mlp_forward.1} parent=1 // pred_check_branch
      %18 = sbr.rel (0) target = $region13
    $region12: #{mlp_forward.1} parent=1 // pred_region
      %20 = vsyncadd [#allocation3], 0
      %s21 = sshll.u32 %s2, 4
      %s22 = int_to_ptr.hbm [resolvable:$true] %s21
      %s23 = sshll.u32 [#allocation2], 4
      %s24 = int_to_ptr.vmem [resolvable:$true] %s23
      %29 = dma.hbm_to_vmem [thread:$0]  %s22, 3072, %s24, [#allocation3], 64, 64, 4
    $region13: #{mlp_forward.1} parent=1 // pred_fallthru
      _
    // Predicated region
    $region14: #{mlp_forward.1} parent=1 // pred_check
      _
    $region15: #{mlp_forward.1} parent=1 // pred_check_branch
      %31 = sbr.rel (0) target = $region17
    $region16: #{mlp_forward.1} parent=1 // pred_region
      _
    $region17: #{mlp_forward.1} parent=1 // pred_fallthru
      _
    // Predicated region
    $region18: #{mlp_forward.1} parent=1 // pred_check
      _
    $region19: #{mlp_forward.1} parent=1 // pred_check_branch
      %33 = sbr.rel (0) target = $region21
    $region20: #{mlp_forward.1} parent=1 // pred_region
      _
    $region21: #{mlp_forward.1} parent=1 // pred_fallthru
      _
    // Predicated region
    $region22: #{mlp_forward.1} parent=1 // pred_check
      _
    $region23: #{mlp_forward.1} parent=1 // pred_check_branch
      %35 = sbr.rel (0) target = $region25
    $region24: #{mlp_forward.1} parent=1 // pred_region
      _
    $region25: #{mlp_forward.1} parent=1 // pred_fallthru
      _
    // Predicated region
    $region26: #{mlp_forward.1} parent=1 // pred_check
      _
    $region27: #{mlp_forward.1} parent=1 // pred_check_branch
      %37 = sbr.rel (0) target = $region29
    $region28: #{mlp_forward.1} parent=1 // pred_region
      %39 = dma.done [#allocation3], 3072
    $region29: #{mlp_forward.1} parent=1 // pred_fallthru
      _
    %v41 = vld [vmem:[%s0] sm:$0xff]
    %v42 = vpack.c.bf16 %v41, %v41
    %v43 = vld [vmem:[%s1] sm:$0xf]
    %v44 = vld [vmem:[%s4] sm:$0x1]
    %v46 = vperm.slane %v44, 0
    %vm48 = vcmask 64512
    %v50 = vsel %vm48, %v42, 0
    %vm52 = vcmask 1043456
    %v54 = vsel %vm52, %v43, 0
    %56 = vmatpush.bf16.msra.mxu0 0
    %57 = vmatpush.bf16.msra.mxu0 0
    %58 = vmatpush.bf16.msra.mxu0 0
    %59 = vmatpush.bf16.msra.mxu0 0
    %60 = vmatpush.bf16.msra.mxu0 0
    %61 = vmatpush.bf16.msra.mxu0 0
    %62 = vmatpush.bf16.msra.mxu0 0
    %63 = vmatpush.bf16.msra.mxu0 %v54
    %64 = vmatmul.bf16.gmra.mxu0 %v50
    %v65 = vpop.f32.mrf.mxu0
    %v66 = vadd.f32 %v46, %v65
    %v67 = vpop.f32.mrf.mxu0
    %68 = vdwg.mxu0
    %v69 = vmul.f32 %v66, 0.5
    %v70 = vtanh.pop %v69
    %v71 = vmul.f32 %v70, 0.5
    %v72 = vadd.f32 %v71, 0.5
    %v73 = vpack.c.bf16 %v72, %v72
    %v74 = vld [vmem:[#allocation2] sm:$0xf]
    %v75 = vld [vmem:[#allocation2 + $0x4] sm:$0xf]
    %v76 = vld [vmem:[#allocation2 + $0x8] sm:$0xf]
    %v77 = vld [vmem:[#allocation2 + $0xc] sm:$0xf]
    %v78 = vld [vmem:[#allocation2 + $0x10] sm:$0xf]
    %v79 = vld [vmem:[#allocation2 + $0x14] sm:$0xf]
    %v80 = vld [vmem:[#allocation2 + $0x18] sm:$0xf]
    %v81 = vld [vmem:[#allocation2 + $0x1c] sm:$0xf]
    %v82 = vld [vmem:[#allocation2 + $0x20] sm:$0xf]
    %v83 = vld [vmem:[#allocation2 + $0x24] sm:$0xf]
    %v84 = vld [vmem:[#allocation2 + $0x28] sm:$0xf]
    %v85 = vld [vmem:[#allocation2 + $0x2c] sm:$0xf]
    %v86 = vld [vmem:[#allocation2 + $0x30] sm:$0xf]
    %v87 = vld [vmem:[#allocation2 + $0x34] sm:$0xf]
    %v88 = vld [vmem:[#allocation2 + $0x38] sm:$0xf]
    %v89 = vld [vmem:[#allocation2 + $0x3c] sm:$0xf]
    %s90 = scalar_lea.vmem %s4, 1
    %v91 = vld [vmem:[%s90] sm:$0x1]
    %v93 = vperm.slane %v91, 0
    %v111 = vunpack.c.l.b16 %v74
    %v112 = vunpack.c.l.b16 %v75
    %v113 = vunpack.c.l.b16 %v76
    %v114 = vunpack.c.l.b16 %v77
    %v115 = vunpack.c.l.b16 %v78
    %v116 = vunpack.c.l.b16 %v79
    %v117 = vunpack.c.l.b16 %v80
    %v118 = vunpack.c.l.b16 %v81
    %v119 = vunpack.c.l.b16 %v82
    %v120 = vunpack.c.l.b16 %v83
    %v121 = vunpack.c.l.b16 %v84
    %v122 = vunpack.c.l.b16 %v85
    %v123 = vunpack.c.l.b16 %v86
    %v124 = vunpack.c.l.b16 %v87
    %v125 = vunpack.c.l.b16 %v88
    %v126 = vunpack.c.l.b16 %v89
    %v127 = vpack.c.b16 %v112, %v111
    %v128 = vpack.c.b16 %v114, %v113
    %v129 = vpack.c.b16 %v116, %v115
    %v130 = vpack.c.b16 %v118, %v117
    %v131 = vpack.c.b16 %v120, %v119
    %v132 = vpack.c.b16 %v122, %v121
    %v133 = vpack.c.b16 %v124, %v123
    %v134 = vpack.c.b16 %v126, %v125
    %143 = vmatpush.bf16.msra.mxu0 %v134
    %144 = vmatpush.bf16.msra.mxu0 %v133
    %145 = vmatpush.bf16.msra.mxu0 %v132
    %146 = vmatpush.bf16.msra.mxu0 %v131
    %147 = vmatpush.bf16.msra.mxu0 %v130
    %148 = vmatpush.bf16.msra.mxu0 %v129
    %149 = vmatpush.bf16.msra.mxu0 %v128
    %150 = vmatpush.bf16.msra.mxu0 %v127
    %151 = vmatmul.bf16.gmra.mxu0 %v73
    %v152 = vpop.f32.mrf.mxu0
    %v153 = vadd.f32 %v93, %v152
    %v154 = vpop.f32.mrf.mxu0
    %155 = vdwg.mxu0
    %v156 = vmul.f32 %v153, 0.5
    %v157 = vtanh.pop %v156
    %v158 = vmul.f32 %v157, 0.5
    %v159 = vadd.f32 %v158, 0.5
    %v160 = vpack.c.bf16 %v159, %v159
    %s161 = scalar_lea.vmem [#allocation2], 64
    %v162 = vld [vmem:[%s161] sm:$0xf]
    %v163 = vld [vmem:[%s161 + $0x4] sm:$0xf]
    %v164 = vld [vmem:[%s161 + $0x8] sm:$0xf]
    %v165 = vld [vmem:[%s161 + $0xc] sm:$0xf]
    %v166 = vld [vmem:[%s161 + $0x10] sm:$0xf]
    %v167 = vld [vmem:[%s161 + $0x14] sm:$0xf]
    %v168 = vld [vmem:[%s161 + $0x18] sm:$0xf]
    %v169 = vld [vmem:[%s161 + $0x1c] sm:$0xf]
    %v170 = vld [vmem:[%s161 + $0x20] sm:$0xf]
    %v171 = vld [vmem:[%s161 + $0x24] sm:$0xf]
    %v172 = vld [vmem:[%s161 + $0x28] sm:$0xf]
    %v173 = vld [vmem:[%s161 + $0x2c] sm:$0xf]
    %v174 = vld [vmem:[%s161 + $0x30] sm:$0xf]
    %v175 = vld [vmem:[%s161 + $0x34] sm:$0xf]
    %v176 = vld [vmem:[%s161 + $0x38] sm:$0xf]
    %v177 = vld [vmem:[%s161 + $0x3c] sm:$0xf]
    %s178 = scalar_lea.vmem %s4, 2
    %v179 = vld [vmem:[%s178] sm:$0x1]
    %v181 = vperm.slane %v179, 0
    %v199 = vunpack.c.l.b16 %v162
    %v200 = vunpack.c.l.b16 %v163
    %v201 = vunpack.c.l.b16 %v164
    %v202 = vunpack.c.l.b16 %v165
    %v203 = vunpack.c.l.b16 %v166
    %v204 = vunpack.c.l.b16 %v167
    %v205 = vunpack.c.l.b16 %v168
    %v206 = vunpack.c.l.b16 %v169
    %v207 = vunpack.c.l.b16 %v170
    %v208 = vunpack.c.l.b16 %v171
    %v209 = vunpack.c.l.b16 %v172
    %v210 = vunpack.c.l.b16 %v173
    %v211 = vunpack.c.l.b16 %v174
    %v212 = vunpack.c.l.b16 %v175
    %v213 = vunpack.c.l.b16 %v176
    %v214 = vunpack.c.l.b16 %v177
    %v215 = vpack.c.b16 %v200, %v199
    %v216 = vpack.c.b16 %v202, %v201
    %v217 = vpack.c.b16 %v204, %v203
    %v218 = vpack.c.b16 %v206, %v205
    %v219 = vpack.c.b16 %v208, %v207
    %v220 = vpack.c.b16 %v210, %v209
    %v221 = vpack.c.b16 %v212, %v211
    %v222 = vpack.c.b16 %v214, %v213
    %231 = vmatpush.bf16.msra.mxu0 %v222
    %232 = vmatpush.bf16.msra.mxu0 %v221
    %233 = vmatpush.bf16.msra.mxu0 %v220
    %234 = vmatpush.bf16.msra.mxu0 %v219
    %235 = vmatpush.bf16.msra.mxu0 %v218
    %236 = vmatpush.bf16.msra.mxu0 %v217
    %237 = vmatpush.bf16.msra.mxu0 %v216
    %238 = vmatpush.bf16.msra.mxu0 %v215
    %239 = vmatmul.bf16.gmra.mxu0 %v160
    %v240 = vpop.f32.mrf.mxu0
    %v241 = vadd.f32 %v181, %v240
    %v242 = vpop.f32.mrf.mxu0
    %243 = vdwg.mxu0
    %v244 = vmul.f32 %v241, 0.5
    %v245 = vtanh.pop %v244
    %v246 = vmul.f32 %v245, 0.5
    %v247 = vadd.f32 %v246, 0.5
    %v248 = vpack.c.bf16 %v247, %v247
    %s249 = scalar_lea.vmem [#allocation2], 128
    %v250 = vld [vmem:[%s249] sm:$0xf]
    %v251 = vld [vmem:[%s249 + $0x4] sm:$0xf]
    %v252 = vld [vmem:[%s249 + $0x8] sm:$0xf]
    %v253 = vld [vmem:[%s249 + $0xc] sm:$0xf]
    %v254 = vld [vmem:[%s249 + $0x10] sm:$0xf]
    %v255 = vld [vmem:[%s249 + $0x14] sm:$0xf]
    %v256 = vld [vmem:[%s249 + $0x18] sm:$0xf]
    %v257 = vld [vmem:[%s249 + $0x1c] sm:$0xf]
    %v258 = vld [vmem:[%s249 + $0x20] sm:$0xf]
    %v259 = vld [vmem:[%s249 + $0x24] sm:$0xf]
    %v260 = vld [vmem:[%s249 + $0x28] sm:$0xf]
    %v261 = vld [vmem:[%s249 + $0x2c] sm:$0xf]
    %v262 = vld [vmem:[%s249 + $0x30] sm:$0xf]
    %v263 = vld [vmem:[%s249 + $0x34] sm:$0xf]
    %v264 = vld [vmem:[%s249 + $0x38] sm:$0xf]
    %v265 = vld [vmem:[%s249 + $0x3c] sm:$0xf]
    %s266 = scalar_lea.vmem %s4, 3
    %v267 = vld [vmem:[%s266] sm:$0x1]
    %v269 = vperm.slane %v267, 0
    %v287 = vunpack.c.l.b16 %v250
    %v288 = vunpack.c.l.b16 %v251
    %v289 = vunpack.c.l.b16 %v252
    %v290 = vunpack.c.l.b16 %v253
    %v291 = vunpack.c.l.b16 %v254
    %v292 = vunpack.c.l.b16 %v255
    %v293 = vunpack.c.l.b16 %v256
    %v294 = vunpack.c.l.b16 %v257
    %v295 = vunpack.c.l.b16 %v258
    %v296 = vunpack.c.l.b16 %v259
    %v297 = vunpack.c.l.b16 %v260
    %v298 = vunpack.c.l.b16 %v261
    %v299 = vunpack.c.l.b16 %v262
    %v300 = vunpack.c.l.b16 %v263
    %v301 = vunpack.c.l.b16 %v264
    %v302 = vunpack.c.l.b16 %v265
    %v303 = vpack.c.b16 %v288, %v287
    %v304 = vpack.c.b16 %v290, %v289
    %v305 = vpack.c.b16 %v292, %v291
    %v306 = vpack.c.b16 %v294, %v293
    %v307 = vpack.c.b16 %v296, %v295
    %v308 = vpack.c.b16 %v298, %v297
    %v309 = vpack.c.b16 %v300, %v299
    %v310 = vpack.c.b16 %v302, %v301
    %319 = vmatpush.bf16.msra.mxu0 %v310
    %320 = vmatpush.bf16.msra.mxu0 %v309
    %321 = vmatpush.bf16.msra.mxu0 %v308
    %322 = vmatpush.bf16.msra.mxu0 %v307
    %323 = vmatpush.bf16.msra.mxu0 %v306
    %324 = vmatpush.bf16.msra.mxu0 %v305
    %325 = vmatpush.bf16.msra.mxu0 %v304
    %326 = vmatpush.bf16.msra.mxu0 %v303
    %327 = vmatmul.bf16.gmra.mxu0 %v248
    %v328 = vpop.f32.mrf.mxu0
    %v329 = vadd.f32 %v269, %v328
    %v330 = vpop.f32.mrf.mxu0
    %331 = vdwg.mxu0
    %v332 = vmul.f32 %v329, 0.5
    %v333 = vtanh.pop %v332
    %v334 = vmul.f32 %v333, 0.5
    %v335 = vadd.f32 %v334, 0.5
    %v336 = vpack.c.bf16 %v335, %v335
    %v337 = vld [vmem:[%s3] sm:$0xf]
    %v338 = vld [vmem:[%s3 + $0x4] sm:$0xf]
    %v339 = vld [vmem:[%s3 + $0x8] sm:$0xf]
    %v340 = vld [vmem:[%s3 + $0xc] sm:$0xf]
    %v341 = vld [vmem:[%s3 + $0x10] sm:$0xf]
    %v342 = vld [vmem:[%s3 + $0x14] sm:$0xf]
    %v343 = vld [vmem:[%s3 + $0x18] sm:$0xf]
    %v344 = vld [vmem:[%s3 + $0x1c] sm:$0xf]
    %v345 = vld [vmem:[%s3 + $0x20] sm:$0xf]
    %v346 = vld [vmem:[%s3 + $0x24] sm:$0xf]
    %v347 = vld [vmem:[%s3 + $0x28] sm:$0xf]
    %v348 = vld [vmem:[%s3 + $0x2c] sm:$0xf]
    %v349 = vld [vmem:[%s3 + $0x30] sm:$0xf]
    %v350 = vld [vmem:[%s3 + $0x34] sm:$0xf]
    %v351 = vld [vmem:[%s3 + $0x38] sm:$0xf]
    %v352 = vld [vmem:[%s3 + $0x3c] sm:$0xf]
    %v353 = vld [vmem:[%s5] sm:$0x1]
    %v355 = vperm.slane %v353, 0
    %v373 = vunpack.c.l.b16 %v337
    %v374 = vunpack.c.l.b16 %v338
    %v375 = vunpack.c.l.b16 %v339
    %v376 = vunpack.c.l.b16 %v340
    %v377 = vunpack.c.l.b16 %v341
    %v378 = vunpack.c.l.b16 %v342
    %v379 = vunpack.c.l.b16 %v343
    %v380 = vunpack.c.l.b16 %v344
    %v381 = vunpack.c.l.b16 %v345
    %v382 = vunpack.c.l.b16 %v346
    %v383 = vunpack.c.l.b16 %v347
    %v384 = vunpack.c.l.b16 %v348
    %v385 = vunpack.c.l.b16 %v349
    %v386 = vunpack.c.l.b16 %v350
    %v387 = vunpack.c.l.b16 %v351
    %v388 = vunpack.c.l.b16 %v352
    %v389 = vpack.c.b16 %v374, %v373
    %v390 = vpack.c.b16 %v376, %v375
    %v391 = vpack.c.b16 %v378, %v377
    %v392 = vpack.c.b16 %v380, %v379
    %v393 = vpack.c.b16 %v382, %v381
    %v394 = vpack.c.b16 %v384, %v383
    %v395 = vpack.c.b16 %v386, %v385
    %v396 = vpack.c.b16 %v388, %v387
    %405 = vmatpush.bf16.msra.mxu0 %v396
    %406 = vmatpush.bf16.msra.mxu0 %v395
    %407 = vmatpush.bf16.msra.mxu0 %v394
    %408 = vmatpush.bf16.msra.mxu0 %v393
    %409 = vmatpush.bf16.msra.mxu0 %v392
    %410 = vmatpush.bf16.msra.mxu0 %v391
    %411 = vmatpush.bf16.msra.mxu0 %v390
    %412 = vmatpush.bf16.msra.mxu0 %v389
    %413 = vmatmul.bf16.gmra.mxu0 %v336
    %v414 = vpop.f32.mrf.mxu0
    %v415 = vadd.f32 %v355, %v414
    %v416 = vpop.f32.mrf.mxu0
    %417 = vdwg.mxu0
    %418 = vst.msk [vmem:[#allocation5] sm:$0xff] %vm48, %v415
    // Predicated region
    $region30: #{mlp_forward.1} parent=1 // pred_check
      _
    $region31: #{mlp_forward.1} parent=1 // pred_check_branch
      %420 = sbr.rel (0) target = $region33
    $region32: #{mlp_forward.1} parent=1 // pred_region
      %422 = vsyncadd [#allocation4], 0
      %s424 = sshll.u32 [#allocation5], 4
      %s425 = int_to_ptr.vmem [resolvable:$true] %s424
      %s426 = sshll.u32 %s6, 4
      %s427 = int_to_ptr.hbm [resolvable:$true] %s426
      %429 = dma.vmem_to_hbm [thread:$0]  %s425, 128, %s427, [#allocation4]
    $region33: #{mlp_forward.1} parent=1 // pred_fallthru
      _
    // Predicated region
    $region34: #{mlp_forward.1} parent=1 // pred_check
      _
    $region35: #{mlp_forward.1} parent=1 // pred_check_branch
      %431 = sbr.rel (0) target = $region37
    $region36: #{mlp_forward.1} parent=1 // pred_region
      %433 = dma.done [#allocation4], 128
    $region37: #{mlp_forward.1} parent=1 // pred_fallthru
      _
    %434 = vsyncpa [#allocation3], 1
    %435 = vsyncpa [#allocation4], 1

</llo_original>
